<compile_context>
chip_gen: v5e
topology: v5e:2x2
jax: 0.10.0
libtpu: 0.0.40
codegen_flags: <defaults>
</compile_context>

<pallas_src>
import jax
import jax.numpy as jnp
from jax.experimental import pallas as pl
from jax.experimental.pallas import tpu as pltpu

LANES = 128
SUBLANES = 8
TARGET_TILE_ROWS = 2048  # 2048 x 128 x 4 B = 1 MiB per f32 input tile


def _make_sse_kernel(tile_rows: int, steps_per_shard: int, m_rows: int, needs_mask: bool):
    """Build the sum-of-squared-errors kernel for static tiling parameters."""

    def kernel(pred_ref, gt_ref, out_ref):
        # out_ref is the per-shard (8, 128) partial-sum accumulator (same block is
        # revisited across the "arbitrary" reduction axis).  Zero it on step 0.
        @pl.when(pl.program_id(1) == 0)
        def _():
            out_ref[...] = jnp.zeros_like(out_ref)

        d = pred_ref[...].astype(jnp.float32) - gt_ref[...].astype(jnp.float32)
        sq = d * d

        if needs_mask:
            # Zero out rows past the end of the real data (partial last tile and/or
            # the clamped over-coverage tile of the last shard).
            t = pl.program_id(0) * steps_per_shard + pl.program_id(1)
            row = jax.lax.broadcasted_iota(jnp.int32, (tile_rows, LANES), 0) + t * tile_rows
            sq = jnp.where(row < m_rows, sq, jnp.float32(0.0))

        # Pure elementwise (VALU) accumulation into (8, 128) partial sums.  The final
        # cross-lane reduce is paid exactly once, outside the kernel.
        out_ref[...] += sq.reshape(tile_rows // SUBLANES, SUBLANES, LANES).sum(axis=0)

    return kernel


def mse_loss_pallas(pred_depth: jax.Array, gt_depth: jax.Array) -> jax.Array:
    """torch.nn.functional.mse_loss(pred, gt, reduction='mean') equivalent."""
    assert pred_depth.shape == gt_depth.shape
    n_elems = pred_depth.size

    # Flatten only (no dtype cast here; the cast to f32 happens inside the kernel).
    p = pred_depth.reshape(-1)
    g = gt_depth.reshape(-1)

    # Pad (only if needed) to a multiple of one (8, 128) vreg so the lane-dense slab
    # reshapes cleanly.  Padded entries are 0 vs 0 and contribute nothing to the SSE.
    chunk = SUBLANES * LANES
    pad = (-n_elems) % chunk
    if pad:
        p = jnp.pad(p, (0, pad))
        g = jnp.pad(g, (0, pad))

    m = p.size // LANES  # always a multiple of 8
    p2 = p.reshape(m, LANES)
    g2 = g.reshape(m, LANES)

    tile_rows = min(TARGET_TILE_ROWS, m)  # multiple of 8 by construction
    num_tiles = pl.cdiv(m, tile_rows)

    # Shard the row range across a leading "parallel" axis (v7x megacore).  Only shard
    # when the possible single extra masked step is a negligible fraction of the work.
    if num_tiles % 2 == 0 or num_tiles >= 16:
        num_shards = 2
    else:
        num_shards = 1
    steps_per_shard = pl.cdiv(num_tiles, num_shards)

    overcover = num_shards * steps_per_shard != num_tiles
    partial_last = num_tiles * tile_rows != m
    needs_mask = overcover or partial_last

    if overcover:
        last_tile = num_tiles - 1
        in_map = lambda s, i: (jnp.minimum(s * steps_per_shard + i, last_tile), 0)
    else:
        in_map = lambda s, i: (s * steps_per_shard + i, 0)

    kernel = _make_sse_kernel(tile_rows, steps_per_shard, m, needs_mask)

    partials = pl.pallas_call(
        kernel,
        out_shape=jax.ShapeDtypeStruct((num_shards, SUBLANES, LANES), jnp.float32),
        grid_spec=pltpu.PrefetchScalarGridSpec(
            num_scalar_prefetch=0,
            grid=(num_shards, steps_per_shard),
            in_specs=[
                pl.BlockSpec((tile_rows, LANES), in_map),
                pl.BlockSpec((tile_rows, LANES), in_map),
            ],
            # Squeeze the shard axis so the kernel sees an (8, 128) accumulator block
            # that is revisited across the reduction ("arbitrary") axis.
            out_specs=pl.BlockSpec((None, SUBLANES, LANES), lambda s, i: (s, 0, 0)),
        ),
        compiler_params=pltpu.CompilerParams(
            dimension_semantics=("parallel", "arbitrary"),
        ),
    )(p2, g2)

    # Single final reduce + mean over the *original* element count (glue, not hot path).
    return (jnp.sum(partials) / jnp.float32(n_elems)).astype(jnp.float32)


class L2Loss:
    """JAX/Pallas port of the PyTorch L2Loss module (only uses pred_depth & gt_depth)."""

    def __call__(self, query_record: dict) -> jax.Array:
        return mse_loss_pallas(query_record["pred_depth"], query_record["gt_depth"])


if __name__ == "__main__":
    key = jax.random.PRNGKey(0)
    k1, k2 = jax.random.split(key)
    B, C, H, W = 2, 1, 16, 16
    pred_depth = jax.random.uniform(k1, (B, C, H, W), dtype=jnp.float32) * 10.0
    gt_depth = jax.random.uniform(k2, (B, C, H, W), dtype=jnp.float32) * 10.0

    loss_fn = L2Loss()
    query_record = {"pred_depth": pred_depth, "gt_depth": gt_depth}
    loss = loss_fn(query_record)
    jax.block_until_ready(loss)

    # Reference check against plain JAX mean-squared-error.
    ref = jnp.mean((pred_depth - gt_depth) ** 2)
    assert jnp.allclose(loss, ref, rtol=1e-5, atol=1e-6), (loss, ref)

    # Second check at a larger, non-tile-aligned size to exercise masking/sharding.
    k3, k4 = jax.random.split(k2)
    big_p = jax.random.uniform(k3, (2, 1, 120, 160), dtype=jnp.float32) * 10.0
    big_g = jax.random.uniform(k4, (2, 1, 120, 160), dtype=jnp.float32) * 10.0
    big_loss = mse_loss_pallas(big_p, big_g)
    jax.block_until_ready(big_loss)
    big_ref = jnp.mean((big_p - big_g) ** 2)
    assert jnp.allclose(big_loss, big_ref, rtol=1e-5, atol=1e-6), (big_loss, big_ref)

    print("KERNEL_OK")
</pallas_src>

<mosaic_0001>
module attributes {stable_mosaic.version = 11 : i64} {
  func.func @kernel(%arg0: i32, %arg1: i32, %arg2: memref<8x128xf32, #tpu.memory_space<vmem>>, %arg3: memref<8x128xf32, #tpu.memory_space<vmem>>, %arg4: memref<1x8x128xf32, #tpu.memory_space<vmem>>) attributes {dimension_semantics = [#tpu.dimension_semantics<parallel>, #tpu.dimension_semantics<arbitrary>], iteration_bounds = array<i64: 1, 1>, scalar_prefetch = 0 : i64, scratch_operands = 0 : i64, tpu.core_type = #tpu.core_type<tc>, window_params = [{transform_indices = @transform_0, window_bounds = array<i64: 8, 128>}, {transform_indices = @transform_1, window_bounds = array<i64: 8, 128>}, {transform_indices = @transform_2, window_bounds = array<i64: 1, 8, 128>}]} {
    %c0_i32 = arith.constant 0 : i32
    %0 = arith.cmpi eq, %arg1, %c0_i32 : i32
    %1 = arith.extui %0 : i1 to i32
    %c0_i32_0 = arith.constant 0 : i32
    %2 = arith.cmpi ne, %1, %c0_i32_0 : i32
    scf.if %2 {
      %cst_10 = arith.constant 0.000000e+00 : f32
      %15 = vector.broadcast %cst_10 : f32 to vector<8x128xf32>
      %c0_11 = arith.constant 0 : index
      %c0_12 = arith.constant 0 : index
      %c0_13 = arith.constant 0 : index
      %16 = vector.load %arg4[%c0_11, %c0_12, %c0_13] : memref<1x8x128xf32, #tpu.memory_space<vmem>>, vector<1x8x128xf32>
      %17 = vector.shape_cast %16 : vector<1x8x128xf32> to vector<8x128xf32>
      %18 = vector.shape_cast %15 : vector<8x128xf32> to vector<1x8x128xf32>
      tpu.vector_store %arg4[%c0_11, %c0_12, %c0_13], %18 {strides = array<i32>} : memref<1x8x128xf32, #tpu.memory_space<vmem>>, vector<1x8x128xf32>,
    } else {
    }
    %c0 = arith.constant 0 : index
    %c0_1 = arith.constant 0 : index
    %3 = vector.load %arg2[%c0, %c0_1] : memref<8x128xf32, #tpu.memory_space<vmem>>, vector<8x128xf32>
    %c0_2 = arith.constant 0 : index
    %c0_3 = arith.constant 0 : index
    %4 = vector.load %arg3[%c0_2, %c0_3] : memref<8x128xf32, #tpu.memory_space<vmem>>, vector<8x128xf32>
    %5 = arith.subf %3, %4 : vector<8x128xf32>
    %6 = arith.mulf %5, %5 : vector<8x128xf32>
    %c0_4 = arith.constant 0 : index
    %c0_5 = arith.constant 0 : index
    %c0_6 = arith.constant 0 : index
    %7 = vector.load %arg4[%c0_4, %c0_5, %c0_6] : memref<1x8x128xf32, #tpu.memory_space<vmem>>, vector<1x8x128xf32>
    %8 = vector.shape_cast %7 : vector<1x8x128xf32> to vector<8x128xf32>
    %9 = vector.shape_cast %6 : vector<8x128xf32> to vector<1x8x128xf32>
    %cst = arith.constant dense<0.000000e+00> : vector<8x128xf32>
    %10 = vector.multi_reduction <add>, %9, %cst [0] : vector<1x8x128xf32> to vector<8x128xf32>
    %11 = arith.addf %8, %10 : vector<8x128xf32>
    %c0_7 = arith.constant 0 : index
    %c0_8 = arith.constant 0 : index
    %c0_9 = arith.constant 0 : index
    %12 = vector.load %arg4[%c0_7, %c0_8, %c0_9] : memref<1x8x128xf32, #tpu.memory_space<vmem>>, vector<1x8x128xf32>
    %13 = vector.shape_cast %12 : vector<1x8x128xf32> to vector<8x128xf32>
    %14 = vector.shape_cast %11 : vector<8x128xf32> to vector<1x8x128xf32>
    tpu.vector_store %arg4[%c0_7, %c0_8, %c0_9], %14 {strides = array<i32>} : memref<1x8x128xf32, #tpu.memory_space<vmem>>, vector<1x8x128xf32>,
    return
  }
  func.func @transform_0(%arg0: i32, %arg1: i32) -> (i32, i32) {
    %c1_i32 = arith.constant 1 : i32
    %0 = arith.muli %arg0, %c1_i32 : i32
    %1 = arith.addi %0, %arg1 : i32
    %c0_i32 = arith.constant 0 : i32
    %c0_i32_0 = arith.constant 0 : i32
    return %1, %c0_i32 : i32, i32
  }
  func.func @transform_1(%arg0: i32, %arg1: i32) -> (i32, i32) {
    %c1_i32 = arith.constant 1 : i32
    %0 = arith.muli %arg0, %c1_i32 : i32
    %1 = arith.addi %0, %arg1 : i32
    %c0_i32 = arith.constant 0 : i32
    %c0_i32_0 = arith.constant 0 : i32
    return %1, %c0_i32 : i32, i32
  }
  func.func @transform_2(%arg0: i32, %arg1: i32) -> (i32, i32, i32) {
    %c0_i32 = arith.constant 0 : i32
    %c0_i32_0 = arith.constant 0 : i32
    %c0_i32_1 = arith.constant 0 : i32
    return %arg0, %c0_i32, %c0_i32_0 : i32, i32, i32
  }
}

</mosaic_0001>

<llo_original>
// kernel: tpu_custom_call.1
$region0: #{tpu_custom_call.1}
  #allocation0 [shape = 'u32[]', space=smem, size = 0x4, offset = 0x4, fixed_abs, tag = 'smem constant byte address 0x4 - core index']
  #allocation1 [shape = 'u32[72,128]{1,0:T(1,128)}', space=vmem, size = 0x9000, scoped, tag = 'internal scratch']
  %s0 = inlined_call_operand.hbm [shape: f32[8,128], index: 0, kind: input, shape index: {}]
  %s1 = inlined_call_operand.hbm [shape: f32[8,128], index: 1, kind: input, shape index: {}]
  %s2 = inlined_call_operand.hbm [shape: f32[1,8,128], index: 2, kind: output, shape index: {}]
  %s3 = sld [smem:[#allocation0]]
  $region30: #{tpu_custom_call.1} parent=0
    _
  %s5 = ssub.s32 1, %s3
  %s6 = scalar_select 0, %s5, %s3
  $region1: #{tpu_custom_call.1} parent=0
    #allocation2 [shape = 'u8[4096]{0}', space=vmem, size = 0x1000, scoped, tag = 'input window, operand 0, single buffered']
    #allocation3 [shape = 's32[1]{0}', space=sflag, size = 0x4, scoped, tag = 'scoped memory for tpu_custom_call.1']
    #allocation4 [shape = 's32[1]{0}', space=sflag, size = 0x4, scoped, tag = 'scoped memory for tpu_custom_call.1']
    #allocation5 [shape = 'u8[4096]{0}', space=vmem, size = 0x1000, scoped, tag = 'input window, operand 1, single buffered']
    #allocation6 [shape = 's32[1]{0}', space=sflag, size = 0x4, scoped, tag = 'scoped memory for tpu_custom_call.1']
    #allocation7 [shape = 'u8[4096]{0}', space=vmem, size = 0x1000, scoped, tag = 'output window, operand 0, single buffered']
    %7 = vsyncpa [#allocation3], 0
    %8 = vsyncpa [#allocation6], 0
    %9 = vsyncpa [#allocation4], 0
    // Predicated region
    $region2: #{tpu_custom_call.1} parent=1 // pred_check
      _
    $region3: #{tpu_custom_call.1} parent=1 // pred_check_branch
      %11 = sbr.rel (0) target = $region5
    $region4: #{tpu_custom_call.1} parent=1 // pred_region
      %s12 = sadd.s32 0, 0
      %14 = vsyncadd [#allocation3], 0
      %s15 = smul.addr %s12, 8
      %s16 = scalar_lea.hbm %s0, %s15
      %s18 = sshll.u32 %s16, 4
      %s19 = int_to_ptr.hbm [resolvable:$true] %s18
      %s20 = sshll.u32 [#allocation2], 4
      %s21 = int_to_ptr.vmem [resolvable:$true] %s20
      %23 = dma.hbm_to_vmem [thread:$0]  %s19, 128, %s21, [#allocation3]
    $region5: #{tpu_custom_call.1} parent=1 // pred_fallthru
      _
    // Predicated region
    $region6: #{tpu_custom_call.1} parent=1 // pred_check
      _
    $region7: #{tpu_custom_call.1} parent=1 // pred_check_branch
      %25 = sbr.rel (0) target = $region9
    $region8: #{tpu_custom_call.1} parent=1 // pred_region
      %s26 = sadd.s32 0, 0
      %28 = vsyncadd [#allocation6], 0
      %s29 = smul.addr %s26, 8
      %s30 = scalar_lea.hbm %s1, %s29
      %s32 = sshll.u32 %s30, 4
      %s33 = int_to_ptr.hbm [resolvable:$true] %s32
      %s34 = sshll.u32 [#allocation5], 4
      %s35 = int_to_ptr.vmem [resolvable:$true] %s34
      %37 = dma.hbm_to_vmem [thread:$0]  %s33, 128, %s35, [#allocation6]
    $region9: #{tpu_custom_call.1} parent=1 // pred_fallthru
      _
    // Predicated region
    $region10: #{tpu_custom_call.1} parent=1 // pred_check
      _
    $region11: #{tpu_custom_call.1} parent=1 // pred_check_branch
      %39 = sbr.rel (0) target = $region13
    $region12: #{tpu_custom_call.1} parent=1 // pred_region
      %41 = dma.done [#allocation3], 128
    $region13: #{tpu_custom_call.1} parent=1 // pred_fallthru
      _
    // Predicated region
    $region14: #{tpu_custom_call.1} parent=1 // pred_check
      _
    $region15: #{tpu_custom_call.1} parent=1 // pred_check_branch
      %43 = sbr.rel (0) target = $region17
    $region16: #{tpu_custom_call.1} parent=1 // pred_region
      %45 = dma.done [#allocation6], 128
    $region17: #{tpu_custom_call.1} parent=1 // pred_fallthru
      _
    %s46 = sadd.s32 0, 0
    %s47 = sadd.s32 0, 0
    %p48 = scmp.eq.s32.totalorder 0, 0
    // Predicated region
    $region18: #{tpu_custom_call.1} parent=1 // pred_check
      %p49 = pneg %p48
    $region19: #{tpu_custom_call.1} parent=1 // pred_check_branch
      %51 = sbr.rel (%p49) target = $region21
    $region20: #{tpu_custom_call.1} parent=1 // pred_region
      %52 = vst [vmem:[#allocation7] sm:$0xff] 0.0
    $region21: #{tpu_custom_call.1} parent=1 // pred_fallthru
      _
    %v53 = vld [vmem:[#allocation2] sm:$0xff]
    %v54 = vld [vmem:[#allocation5] sm:$0xff]
    %v55 = vsub.f32 %v53, %v54
    %v56 = vmul.f32 %v55, %v55
    %v57 = vld [vmem:[#allocation7] sm:$0xff]
    %v58 = vadd.f32 %v56, 0.0
    %v59 = vadd.f32 %v57, %v58
    %60 = vst [vmem:[#allocation7] sm:$0xff] %v59
    // Predicated region
    $region22: #{tpu_custom_call.1} parent=1 // pred_check
      _
    $region23: #{tpu_custom_call.1} parent=1 // pred_check_branch
      %62 = sbr.rel (0) target = $region25
    $region24: #{tpu_custom_call.1} parent=1 // pred_region
      %64 = vsyncadd [#allocation4], 0
      %s66 = sshll.u32 [#allocation7], 4
      %s67 = int_to_ptr.vmem [resolvable:$true] %s66
      %s68 = sshll.u32 %s2, 4
      %s69 = int_to_ptr.hbm [resolvable:$true] %s68
      %71 = dma.vmem_to_hbm [thread:$0]  %s67, 128, %s69, [#allocation4]
    $region25: #{tpu_custom_call.1} parent=1 // pred_fallthru
      _
    // Predicated region
    $region26: #{tpu_custom_call.1} parent=1 // pred_check
      _
    $region27: #{tpu_custom_call.1} parent=1 // pred_check_branch
      %73 = sbr.rel (0) target = $region29
    $region28: #{tpu_custom_call.1} parent=1 // pred_region
      %75 = dma.done [#allocation4], 128
    $region29: #{tpu_custom_call.1} parent=1 // pred_fallthru
      _
    %76 = vsyncpa [#allocation3], 1
    %77 = vsyncpa [#allocation6], 1
    %78 = vsyncpa [#allocation4], 1

</llo_original>
